<compile_context>
chip_gen: v7x
topology: tpu7x:2x2x1
jax: 0.10.0
libtpu: 0.0.40
codegen_flags: <defaults>
</compile_context>

<pallas_src>
import functools

import jax
import jax.numpy as jnp
from jax import lax
from jax.experimental import pallas as pl
from jax.experimental.pallas import tpu as pltpu

_LANES = 128
_SUB = 16   # sublane granule covering f32 (8,128) and bf16 (16,128) tiles


def _round_up(x, m):
    return ((x + m - 1) // m) * m


def _cdiv(a, b):
    return -(-a // b)


def _default_num_cores():
    """Best-effort TensorCore count for the outer 'parallel' grid axis."""
    try:
        dev = jax.devices()[0]
        if dev.platform != "tpu":
            return 1
        return max(1, int(getattr(dev, "num_cores", 1)))
    except Exception:
        return 1


def _vmem_limit_bytes():
    """Scoped VMEM limit: half the physical capacity when queryable.

    64 MiB on v5e/v6e (128 MiB chips), 32 MiB on v7x (64 MiB).  Blocks are
    budgeted at <= 2 MiB each, so even the smaller figure leaves ample
    double-buffering headroom.
    """
    try:
        return int(pltpu.get_tpu_info().vmem_capacity_bytes) // 2
    except Exception:
        return 32 * 1024 * 1024


def _wrs_kernel(p_ref, l_ref, out_ref, acc_ref, *, steps, tr, rows_valid,
                mask_rows):
    """Grid = (nc, steps).  Inner axis = reduction over row tiles."""
    i = pl.program_id(1)

    @pl.when(i == 0)
    def _init():
        acc_ref[...] = jnp.zeros_like(acc_ref)

    # Up-cast on the VPU (hidden under the DMA-bound pipeline), diff, square.
    d = p_ref[...].astype(jnp.float32) - l_ref[...].astype(jnp.float32)

    if mask_rows:
        # Partial last tile / clamped duplicate tile: zero out invalid rows.
        c = pl.program_id(0)
        row0 = (c * steps + i) * tr
        rid = row0 + lax.broadcasted_iota(jnp.int32, (tr, 1), 0)
        d = jnp.where(rid < rows_valid, d, 0.0)

    sq = d * d
    # (tr,128) -> (tr//8, 8, 128): leading dim == vreg index, so the axis-0
    # sum is pure vreg-wise VPU adds into the (8,128) accumulator.
    acc_ref[...] += jnp.sum(sq.reshape(tr // 8, 8, _LANES), axis=0)

    @pl.when(i == steps - 1)
    def _finalize():
        out_ref[...] = acc_ref[...]


def wrs_loss(pred, label, weight, *, block_bytes=2 * 1024 * 1024,
             num_cores=None):
    """Pallas implementation of WRS.forward(pred, label, weight)."""
    assert pred.shape == label.shape
    n_elem = int(pred.size)
    assert n_elem > 0

    # --- weight regularizer: a handful of scalars, plain JAX in the wrapper.
    n_branch = int(weight.shape[0])
    tgt = jnp.float32(1.0 / n_branch)
    w = weight.astype(jnp.float32).reshape(n_branch, -1)
    w_term = jnp.sum(jnp.mean((w - tgt) ** 2, axis=1))

    flat_p = pred.reshape(-1)
    flat_l = label.reshape(-1)
    rows = n_elem // _LANES
    aligned = rows * _LANES

    if aligned < n_elem:
        # Sub-128-element remainder: tiny wrapper-side reduce (negligible).
        # TODO(synk): the prefix slice below still copies pred/label once for
        # non-lane-aligned sizes; a fully copy-free ragged path would need
        # 1-D boundary blocks in the kernel.
        dt = (flat_p[aligned:].astype(jnp.float32)
              - flat_l[aligned:].astype(jnp.float32))
        tail_sq = jnp.sum(dt * dt)
        flat_p = flat_p[:aligned]
        flat_l = flat_l[:aligned]
    else:
        tail_sq = jnp.float32(0.0)

    if rows == 0:
        return tail_sq / jnp.float32(n_elem) + w_term

    p2 = flat_p.reshape(rows, _LANES)
    l2 = flat_l.reshape(rows, _LANES)

    # --- tiling: ~block_bytes per input block, dtype-aware (bf16 gets twice
    # the rows at the same VMEM cost); partial tiles masked in-kernel.
    itemsize = int(jnp.dtype(pred.dtype).itemsize)
    target_rows = max(_SUB, int(block_bytes) // (_LANES * itemsize))
    tr = min(_round_up(target_rows, _SUB), _round_up(rows, _SUB))
    n_tiles = _cdiv(rows, tr)

    nc = int(num_cores) if num_cores is not None else _default_num_cores()
    nc = max(1, min(nc, n_tiles))
    steps = _cdiv(n_tiles, nc)
    mask_rows = (nc * steps * tr != rows)

    if mask_rows:
        last = n_tiles - 1

        def row_map(c, i):
            # Clamp so an uneven core split never indexes past the last tile;
            # the in-kernel row mask zeroes the duplicated contribution.
            return (jnp.minimum(c * steps + i, last), 0)
    else:
        def row_map(c, i):
            return (c * steps + i, 0)

    kernel = functools.partial(
        _wrs_kernel, steps=steps, tr=tr, rows_valid=rows, mask_rows=mask_rows)

    out = pl.pallas_call(
        kernel,
        out_shape=jax.ShapeDtypeStruct((nc * 8, _LANES), jnp.float32),
        grid_spec=pltpu.PrefetchScalarGridSpec(
            num_scalar_prefetch=0,
            grid=(nc, steps),
            in_specs=[
                pl.BlockSpec((tr, _LANES), row_map),
                pl.BlockSpec((tr, _LANES), row_map),
            ],
            out_specs=pl.BlockSpec((8, _LANES), lambda c, i: (c, 0)),
            scratch_shapes=[pltpu.VMEM((8, _LANES), jnp.float32)],
        ),
        compiler_params=pltpu.CompilerParams(
            dimension_semantics=("parallel", "arbitrary"),
            vmem_limit_bytes=_vmem_limit_bytes()),
    )(p2, l2)

    mse = (jnp.sum(out) + tail_sq) / jnp.float32(n_elem)
    return mse + w_term


def wrs_loss_ref(pred, label, weight):
    """Plain-JAX reference for correctness checking."""
    pred = pred.astype(jnp.float32)
    label = label.astype(jnp.float32)
    weight = weight.astype(jnp.float32)
    loss = jnp.mean((pred - label) ** 2)
    n_branch = weight.shape[0]
    tgt = 1.0 / n_branch
    # for i in weight: loss += mse(i, full_like(i, 1/len(weight)))
    loss = loss + jnp.sum(jnp.mean((weight.reshape(n_branch, -1) - tgt) ** 2,
                                   axis=1))
    return loss


if __name__ == "__main__":
    key = jax.random.PRNGKey(0)
    ks = jax.random.split(key, 8)

    # Case 1: lane-aligned f32 NCHW tensors, 8 branch weights.
    pred = jax.random.normal(ks[0], (2, 4, 16, 16), dtype=jnp.float32)
    label = jax.random.normal(ks[1], (2, 4, 16, 16), dtype=jnp.float32)
    weight = jax.random.uniform(ks[2], (8,), dtype=jnp.float32)
    out = jax.block_until_ready(wrs_loss(pred, label, weight))
    ref = wrs_loss_ref(pred, label, weight)
    assert jnp.allclose(out, ref, rtol=1e-5, atol=1e-5), (out, ref)

    # Case 2: bf16 inputs (native-dtype DMA, in-kernel up-cast).
    pred_b = pred.astype(jnp.bfloat16)
    label_b = label.astype(jnp.bfloat16)
    out_b = jax.block_until_ready(wrs_loss(pred_b, label_b, weight))
    ref_b = wrs_loss_ref(pred_b, label_b, weight)
    assert jnp.allclose(out_b, ref_b, rtol=1e-4, atol=1e-4), (out_b, ref_b)

    # Case 3: ragged (non-lane-aligned) size + non-power-of-two weights.
    pred_r = jax.random.normal(ks[3], (2, 3, 15, 15), dtype=jnp.float32)
    label_r = jax.random.normal(ks[4], (2, 3, 15, 15), dtype=jnp.float32)
    weight_r = jax.random.uniform(ks[5], (5,), dtype=jnp.float32)
    out_r = jax.block_until_ready(wrs_loss(pred_r, label_r, weight_r))
    ref_r = wrs_loss_ref(pred_r, label_r, weight_r)
    assert jnp.allclose(out_r, ref_r, rtol=1e-5, atol=1e-5), (out_r, ref_r)

    # Case 4: multi-tile + two-core split + ragged last row tile (small
    # block_bytes to exercise the clamp/mask paths at test scale).
    pred_m = jax.random.normal(ks[6], (2, 4, 60, 60), dtype=jnp.float32)
    label_m = jax.random.normal(ks[7], (2, 4, 60, 60), dtype=jnp.float32)
    out_m = jax.block_until_ready(
        wrs_loss(pred_m, label_m, weight, block_bytes=64 * 1024, num_cores=2))
    ref_m = wrs_loss_ref(pred_m, label_m, weight)
    assert jnp.allclose(out_m, ref_m, rtol=1e-5, atol=1e-5), (out_m, ref_m)

    print("KERNEL_OK")
</pallas_src>

<mosaic_0001>
module attributes {stable_mosaic.version = 11 : i64} {
  func.func @_wrs_kernel(%arg0: i32, %arg1: i32, %arg2: memref<16x128xf32, #tpu.memory_space<vmem>>, %arg3: memref<16x128xf32, #tpu.memory_space<vmem>>, %arg4: memref<8x128xf32, #tpu.memory_space<vmem>>, %arg5: memref<8x128xf32, #tpu.memory_space<vmem>>) attributes {dimension_semantics = [#tpu.dimension_semantics<parallel>, #tpu.dimension_semantics<arbitrary>], iteration_bounds = array<i64: 1, 1>, scalar_prefetch = 0 : i64, scratch_operands = 1 : i64, tpu.core_type = #tpu.core_type<tc>, window_params = [{transform_indices = @transform_0, window_bounds = array<i64: 16, 128>}, {transform_indices = @transform_1, window_bounds = array<i64: 16, 128>}, {transform_indices = @transform_2, window_bounds = array<i64: 8, 128>}]} {
    %c0_i32 = arith.constant 0 : i32
    %0 = arith.cmpi eq, %arg1, %c0_i32 : i32
    %1 = arith.extui %0 : i1 to i32
    %c0_i32_0 = arith.constant 0 : i32
    %2 = arith.cmpi ne, %1, %c0_i32_0 : i32
    scf.if %2 {
      %cst_10 = arith.constant 0.000000e+00 : f32
      %15 = vector.broadcast %cst_10 : f32 to vector<8x128xf32>
      %c0_11 = arith.constant 0 : index
      %c0_12 = arith.constant 0 : index
      %16 = vector.load %arg5[%c0_11, %c0_12] : memref<8x128xf32, #tpu.memory_space<vmem>>, vector<8x128xf32>
      tpu.vector_store %arg5[%c0_11, %c0_12], %15 {strides = array<i32>} : memref<8x128xf32, #tpu.memory_space<vmem>>, vector<8x128xf32>,
    } else {
    }
    %c0 = arith.constant 0 : index
    %c0_1 = arith.constant 0 : index
    %3 = vector.load %arg2[%c0, %c0_1] : memref<16x128xf32, #tpu.memory_space<vmem>>, vector<16x128xf32>
    %c0_2 = arith.constant 0 : index
    %c0_3 = arith.constant 0 : index
    %4 = vector.load %arg3[%c0_2, %c0_3] : memref<16x128xf32, #tpu.memory_space<vmem>>, vector<16x128xf32>
    %5 = arith.subf %3, %4 : vector<16x128xf32>
    %6 = arith.mulf %5, %5 : vector<16x128xf32>
    %c0_4 = arith.constant 0 : index
    %c0_5 = arith.constant 0 : index
    %7 = vector.load %arg5[%c0_4, %c0_5] : memref<8x128xf32, #tpu.memory_space<vmem>>, vector<8x128xf32>
    %8 = vector.shape_cast %6 : vector<16x128xf32> to vector<2x8x128xf32>
    %cst = arith.constant dense<0.000000e+00> : vector<8x128xf32>
    %9 = vector.multi_reduction <add>, %8, %cst [0] : vector<2x8x128xf32> to vector<8x128xf32>
    %10 = arith.addf %7, %9 : vector<8x128xf32>
    %c0_6 = arith.constant 0 : index
    %c0_7 = arith.constant 0 : index
    %11 = vector.load %arg5[%c0_6, %c0_7] : memref<8x128xf32, #tpu.memory_space<vmem>>, vector<8x128xf32>
    tpu.vector_store %arg5[%c0_6, %c0_7], %10 {strides = array<i32>} : memref<8x128xf32, #tpu.memory_space<vmem>>, vector<8x128xf32>,
    %c0_i32_8 = arith.constant 0 : i32
    %12 = arith.cmpi eq, %arg1, %c0_i32_8 : i32
    %13 = arith.extui %12 : i1 to i32
    %c0_i32_9 = arith.constant 0 : i32
    %14 = arith.cmpi ne, %13, %c0_i32_9 : i32
    scf.if %14 {
      %c0_10 = arith.constant 0 : index
      %c0_11 = arith.constant 0 : index
      %15 = vector.load %arg5[%c0_10, %c0_11] : memref<8x128xf32, #tpu.memory_space<vmem>>, vector<8x128xf32>
      %c0_12 = arith.constant 0 : index
      %c0_13 = arith.constant 0 : index
      %16 = vector.load %arg4[%c0_12, %c0_13] : memref<8x128xf32, #tpu.memory_space<vmem>>, vector<8x128xf32>
      tpu.vector_store %arg4[%c0_12, %c0_13], %15 {strides = array<i32>} : memref<8x128xf32, #tpu.memory_space<vmem>>, vector<8x128xf32>,
    } else {
    }
    return
  }
  func.func @transform_0(%arg0: i32, %arg1: i32) -> (i32, i32) {
    %c1_i32 = arith.constant 1 : i32
    %0 = arith.muli %arg0, %c1_i32 : i32
    %1 = arith.addi %0, %arg1 : i32
    %c0_i32 = arith.constant 0 : i32
    %c0_i32_0 = arith.constant 0 : i32
    return %1, %c0_i32 : i32, i32
  }
  func.func @transform_1(%arg0: i32, %arg1: i32) -> (i32, i32) {
    %c1_i32 = arith.constant 1 : i32
    %0 = arith.muli %arg0, %c1_i32 : i32
    %1 = arith.addi %0, %arg1 : i32
    %c0_i32 = arith.constant 0 : i32
    %c0_i32_0 = arith.constant 0 : i32
    return %1, %c0_i32 : i32, i32
  }
  func.func @transform_2(%arg0: i32, %arg1: i32) -> (i32, i32) {
    %c0_i32 = arith.constant 0 : i32
    %c0_i32_0 = arith.constant 0 : i32
    return %arg0, %c0_i32 : i32, i32
  }
}

</mosaic_0001>

<llo_original>
// kernel: tpu_custom_call.1
$region0: #{tpu_custom_call.1}
  #allocation0 [shape = 'u32[]', space=smem, size = 0x4, offset = 0x4, fixed_abs, tag = 'smem constant byte address 0x4 - core index']
  #allocation1 [shape = 'u32[144,128]{1,0:T(1,128)}', space=vmem, size = 0x12000, scoped, tag = 'internal scratch']
  #allocation2 [shape = 'f32[8,128]{1,0:T(8,128)}', space=vmem, size = 0x1000, scoped, tag = 'scratch operand']
  %s0 = inlined_call_operand.hbm [shape: f32[16,128], index: 0, kind: input, shape index: {}]
  %s1 = inlined_call_operand.hbm [shape: f32[16,128], index: 1, kind: input, shape index: {}]
  %s2 = inlined_call_operand.hbm [shape: f32[8,128], index: 2, kind: output, shape index: {}]
  %s3 = sld [smem:[#allocation0]]
  $region34: #{tpu_custom_call.1} parent=0
    _
  %s5 = ssub.s32 1, %s3
  %s6 = scalar_select 0, %s5, %s3
  $region1: #{tpu_custom_call.1} parent=0
    #allocation3 [shape = 'u8[8192]{0}', space=vmem, size = 0x2000, scoped, tag = 'input window, operand 0, single buffered']
    #allocation4 [shape = 's32[1]{0}', space=sflag, size = 0x4, scoped, tag = 'scoped memory for tpu_custom_call.1']
    #allocation5 [shape = 's32[1]{0}', space=sflag, size = 0x4, scoped, tag = 'scoped memory for tpu_custom_call.1']
    #allocation6 [shape = 'u8[8192]{0}', space=vmem, size = 0x2000, scoped, tag = 'input window, operand 1, single buffered']
    #allocation7 [shape = 's32[1]{0}', space=sflag, size = 0x4, scoped, tag = 'scoped memory for tpu_custom_call.1']
    #allocation8 [shape = 'u8[4096]{0}', space=vmem, size = 0x1000, scoped, tag = 'output window, operand 0, single buffered']
    %7 = vsyncpa [#allocation4], 0
    %8 = vsyncpa [#allocation7], 0
    %9 = vsyncpa [#allocation5], 0
    // Predicated region
    $region2: #{tpu_custom_call.1} parent=1 // pred_check
      _
    $region3: #{tpu_custom_call.1} parent=1 // pred_check_branch
      %11 = sbr.rel (0) target = $region5
    $region4: #{tpu_custom_call.1} parent=1 // pred_region
      %s12 = sadd.s32 0, 0
      %s13 = smul.u32 2, %s12
      %s15 = ssub.s32 256, 256
      %16 = vsyncadd [#allocation4], %s15
      %s17 = smul.addr %s13, 128
      %s18 = scalar_lea.hbm %s0, %s17
      %s19 = sshll.u32 [#allocation3], 4
      %s20 = int_to_ptr.vmem [resolvable:$true] %s19
      %25 = dma.hbm_to_vmem [thread:$0]  %s18, 256, %s20, [#allocation4], 128, 128, 8
    $region5: #{tpu_custom_call.1} parent=1 // pred_fallthru
      _
    // Predicated region
    $region6: #{tpu_custom_call.1} parent=1 // pred_check
      _
    $region7: #{tpu_custom_call.1} parent=1 // pred_check_branch
      %27 = sbr.rel (0) target = $region9
    $region8: #{tpu_custom_call.1} parent=1 // pred_region
      %s28 = sadd.s32 0, 0
      %s29 = smul.u32 2, %s28
      %s31 = ssub.s32 256, 256
      %32 = vsyncadd [#allocation7], %s31
      %s33 = smul.addr %s29, 128
      %s34 = scalar_lea.hbm %s1, %s33
      %s35 = sshll.u32 [#allocation6], 4
      %s36 = int_to_ptr.vmem [resolvable:$true] %s35
      %41 = dma.hbm_to_vmem [thread:$0]  %s34, 256, %s36, [#allocation7], 128, 128, 8
    $region9: #{tpu_custom_call.1} parent=1 // pred_fallthru
      _
    // Predicated region
    $region10: #{tpu_custom_call.1} parent=1 // pred_check
      _
    $region11: #{tpu_custom_call.1} parent=1 // pred_check_branch
      %43 = sbr.rel (0) target = $region13
    $region12: #{tpu_custom_call.1} parent=1 // pred_region
      %44 = dma.done [#allocation4], 256
    $region13: #{tpu_custom_call.1} parent=1 // pred_fallthru
      _
    // Predicated region
    $region14: #{tpu_custom_call.1} parent=1 // pred_check
      _
    $region15: #{tpu_custom_call.1} parent=1 // pred_check_branch
      %46 = sbr.rel (0) target = $region17
    $region16: #{tpu_custom_call.1} parent=1 // pred_region
      %47 = dma.done [#allocation7], 256
    $region17: #{tpu_custom_call.1} parent=1 // pred_fallthru
      _
    %s48 = sadd.s32 0, 0
    %s49 = smul.u32 2, %s48
    %s50 = sadd.s32 0, 0
    %s51 = smul.u32 2, %s50
    %p52 = scmp.eq.s32.totalorder 0, 0
    // Predicated region
    $region18: #{tpu_custom_call.1} parent=1 // pred_check
      %p53 = pneg %p52
    $region19: #{tpu_custom_call.1} parent=1 // pred_check_branch
      %55 = sbr.rel (%p53) target = $region21
    $region20: #{tpu_custom_call.1} parent=1 // pred_region
      %56 = vst [vmem:[#allocation2] sm:$0xff] 0.0
    $region21: #{tpu_custom_call.1} parent=1 // pred_fallthru
      _
    %v57 = vld [vmem:[#allocation3] sm:$0xff]
    %v58 = vld [vmem:[#allocation3 + $0x8] sm:$0xff]
    %v59 = vld [vmem:[#allocation6] sm:$0xff]
    %v60 = vld [vmem:[#allocation6 + $0x8] sm:$0xff]
    %v61 = vsub.f32 %v57, %v59
    %v62 = vsub.f32 %v58, %v60
    %v63 = vmul.f32 %v61, %v61
    %v64 = vmul.f32 %v62, %v62
    %v65 = vld [vmem:[#allocation2] sm:$0xff]
    %v66 = vadd.f32 %v63, %v64
    %v67 = vadd.f32 %v65, %v66
    %68 = vst [vmem:[#allocation2] sm:$0xff] %v67
    // Predicated region
    $region22: #{tpu_custom_call.1} parent=1 // pred_check
      %p69 = pneg %p52
    $region23: #{tpu_custom_call.1} parent=1 // pred_check_branch
      %71 = sbr.rel (%p69) target = $region25
    $region24: #{tpu_custom_call.1} parent=1 // pred_region
      %v72 = vld [vmem:[#allocation2] sm:$0xff]
      %73 = vst [vmem:[#allocation8] sm:$0xff] %v72
    $region25: #{tpu_custom_call.1} parent=1 // pred_fallthru
      _
    // Predicated region
    $region26: #{tpu_custom_call.1} parent=1 // pred_check
      _
    $region27: #{tpu_custom_call.1} parent=1 // pred_check_branch
      %75 = sbr.rel (0) target = $region29
    $region28: #{tpu_custom_call.1} parent=1 // pred_region
      %s77 = ssub.s32 128, 128
      %78 = vsyncadd [#allocation5], %s77
      %s80 = sshll.u32 [#allocation8], 4
      %s81 = int_to_ptr.vmem [resolvable:$true] %s80
      %83 = dma.vmem_to_hbm [thread:$0]  %s81, 128, %s2, [#allocation5]
    $region29: #{tpu_custom_call.1} parent=1 // pred_fallthru
      _
    // Predicated region
    $region30: #{tpu_custom_call.1} parent=1 // pred_check
      _
    $region31: #{tpu_custom_call.1} parent=1 // pred_check_branch
      %85 = sbr.rel (0) target = $region33
    $region32: #{tpu_custom_call.1} parent=1 // pred_region
      %86 = dma.done [#allocation5], 128
    $region33: #{tpu_custom_call.1} parent=1 // pred_fallthru
      _
    %87 = vsyncpa [#allocation4], 1
    %88 = vsyncpa [#allocation7], 1
    %89 = vsyncpa [#allocation5], 1

</llo_original>
